<compile_context>
chip_gen: v5e
topology: v5e:2x2
jax: 0.10.0
libtpu: 0.0.40
codegen_flags: <defaults>
</compile_context>

<pallas_src>
import functools

import jax
import jax.numpy as jnp
from jax.experimental import pallas as pl
from jax.experimental.pallas import tpu as pltpu


def _round_up(x: int, m: int) -> int:
    return (x + m - 1) // m * m


def mlp_kernel(x_ref, w1_ref, b1_ref, w2_ref, b2_ref, o_ref):
    # In-kernel cast of the activation tile (no padded bf16 copy of x in HBM).
    x = x_ref[...].astype(jnp.bfloat16)
    # fc1: [tm, in_f] @ [in_f, hid_p] on the MXU, f32 accumulation.
    h = jnp.dot(x, w1_ref[...], preferred_element_type=jnp.float32)
    # Bias + ReLU epilogue in f32 on the VPU (v5e has no bf16 VALU path).
    h = jnp.maximum(h + b1_ref[...], 0.0)
    # dropout(p=0.0) == identity -> omitted.
    # fc2: [tm, hid_p] @ [hid_p, out_p] on the MXU, f32 accumulation.
    o = jnp.dot(h.astype(jnp.bfloat16), w2_ref[...],
                preferred_element_type=jnp.float32)
    # Store in the output dtype (x.dtype) -> lane-dense, half-width stores.
    o_ref[...] = (o + b2_ref[...]).astype(o_ref.dtype)


def prepare_mlp_params(w1, b1, w2, b2):
    """Pad/cast the Linear parameters ONCE (do this at model init, not per call).

    w1: [in_features, hidden]   (PyTorch fc1.weight.T)
    b1: [hidden]
    w2: [hidden, out_features]  (PyTorch fc2.weight.T)
    b2: [out_features]
    """
    in_f, hidden = w1.shape
    out_f = w2.shape[1]
    hid_p = _round_up(hidden, 128)
    out_p = _round_up(out_f, 128)
    # K dim of w1 stays at in_f (matches the unpadded x tile); only the
    # hidden / out dims are padded to lane-dense multiples of 128.
    w1p = jnp.pad(w1.astype(jnp.bfloat16), ((0, 0), (0, hid_p - hidden)))
    b1p = jnp.pad(b1.astype(jnp.float32), (0, hid_p - hidden)).reshape(1, hid_p)
    w2p = jnp.pad(w2.astype(jnp.bfloat16),
                  ((0, hid_p - hidden), (0, out_p - out_f)))
    b2p = jnp.pad(b2.astype(jnp.float32), (0, out_p - out_f)).reshape(1, out_p)
    return w1p, b1p, w2p, b2p


@functools.partial(jax.jit, static_argnames=("out_features", "tm"))
def mlp_forward(x, w1p, b1p, w2p, b2p, *, out_features=None, tm=None):
    """Fused MLP forward on prepared (padded bf16) parameters.

    x: [M, in_features] (any float dtype); returns [M, out_features] in x.dtype.
    """
    M, in_f = x.shape
    hid_p = w1p.shape[1]
    out_p = w2p.shape[1]
    if out_features is None:
        out_features = out_p

    # Token tile: 256 fills a v6e/v7x MXU pass when there is enough work;
    # 128 otherwise so >=2 "parallel" grid steps exist as soon as M >= 256
    # (second v7x TensorCore).  Clamp to the 8-aligned token count so tiny
    # inputs don't launch an oversized masked block.
    if tm is None:
        tm = 256 if M >= 512 else 128
    tm = min(tm, _round_up(M, 8))
    grid = (pl.cdiv(M, tm),)

    flops = 2 * M * (in_f * hid_p + hid_p * out_p)
    bytes_accessed = (x.size * x.dtype.itemsize
                      + w1p.size * 2 + w2p.size * 2
                      + (b1p.size + b2p.size) * 4
                      + M * out_p * x.dtype.itemsize)

    # VMEM budget: double-buffered x/out tiles + resident weights/biases +
    # f32 intermediates, with 2x headroom.  Cap at 48 MiB so we never ask for
    # all of v7x's 64 MiB physical VMEM; v5e/v6e (128 MiB) are unaffected.
    est = (2 * tm * in_f * x.dtype.itemsize
           + 2 * tm * out_p * x.dtype.itemsize
           + w1p.size * 2 + w2p.size * 2
           + (b1p.size + b2p.size) * 4
           + tm * hid_p * 4 + tm * out_p * 4)
    vmem_limit = int(min(48 << 20, max(32 << 20, 2 * est + (4 << 20))))

    out = pl.pallas_call(
        mlp_kernel,
        out_shape=jax.ShapeDtypeStruct((M, out_p), x.dtype),
        grid=grid,
        in_specs=[
            # x tile over the token dim at native dtype; last dim equals the
            # full feature dim (27), so no padded copy of x is needed.
            pl.BlockSpec((tm, in_f), lambda i: (i, 0)),
            # Weights / biases: whole arrays resident in VMEM (fetched once,
            # not re-DMA'd per grid step).
            pl.BlockSpec(memory_space=pltpu.MemorySpace.VMEM),
            pl.BlockSpec(memory_space=pltpu.MemorySpace.VMEM),
            pl.BlockSpec(memory_space=pltpu.MemorySpace.VMEM),
            pl.BlockSpec(memory_space=pltpu.MemorySpace.VMEM),
        ],
        out_specs=pl.BlockSpec((tm, out_p), lambda i: (i, 0)),
        compiler_params=pltpu.CompilerParams(
            dimension_semantics=("parallel",),
            vmem_limit_bytes=vmem_limit),
        cost_estimate=pl.CostEstimate(
            flops=flops, transcendentals=0, bytes_accessed=bytes_accessed),
    )(x, w1p, b1p, w2p, b2p)

    if out_features != out_p:
        out = out[:, :out_features]
    return out


def mlp_reference(x, w1, b1, w2, b2):
    h = jnp.maximum(x @ w1 + b1, 0.0)
    return h @ w2 + b2


if __name__ == "__main__":
    key = jax.random.PRNGKey(0)
    k_x, k_w1, k_b1, k_w2, k_b2 = jax.random.split(key, 5)

    # Shapes consistent with DepthNet: MLP(27, mid_channels, mid_channels)
    # with a small mid_channels=64 and M = batch*num_views = 16 token rows.
    M, in_f, hidden, out_f = 16, 27, 64, 64

    x = jax.random.normal(k_x, (M, in_f), dtype=jnp.float32)

    # Deterministic init mimicking PyTorch Linear (uniform +- 1/sqrt(fan_in)),
    # stored transposed relative to nn.Linear.weight.
    bound1 = 1.0 / (in_f ** 0.5)
    bound2 = 1.0 / (hidden ** 0.5)
    w1 = jax.random.uniform(k_w1, (in_f, hidden), jnp.float32, -bound1, bound1)
    b1 = jax.random.uniform(k_b1, (hidden,), jnp.float32, -bound1, bound1)
    w2 = jax.random.uniform(k_w2, (hidden, out_f), jnp.float32, -bound2, bound2)
    b2 = jax.random.uniform(k_b2, (out_f,), jnp.float32, -bound2, bound2)

    # Pad/cast the parameters once (model-init time), then run the kernel.
    params = prepare_mlp_params(w1, b1, w2, b2)
    out = mlp_forward(x, *params, out_features=out_f)
    out = jax.block_until_ready(out)

    ref = mlp_reference(x, w1, b1, w2, b2)
    assert out.shape == (M, out_f)
    assert out.dtype == x.dtype
    # bf16 matmuls (f32 accumulation) vs. the pure-f32 reference -> loose tol.
    max_err = float(jnp.max(jnp.abs(out - ref)))
    assert jnp.allclose(out, ref, atol=5e-2, rtol=5e-2), (
        f"mismatch vs reference, max abs err = {max_err}")

    print("KERNEL_OK")
</pallas_src>

<mosaic_0001>
module attributes {stable_mosaic.version = 11 : i64} {
  func.func @mlp_kernel(%arg0: i32, %arg1: memref<16x27xf32, #tpu.memory_space<vmem>>, %arg2: memref<27x128xbf16, #tpu.memory_space<vmem>>, %arg3: memref<1x128xf32, #tpu.memory_space<vmem>>, %arg4: memref<128x128xbf16, #tpu.memory_space<vmem>>, %arg5: memref<1x128xf32, #tpu.memory_space<vmem>>, %arg6: memref<16x128xf32, #tpu.memory_space<vmem>>) attributes {dimension_semantics = [#tpu.dimension_semantics<parallel>], iteration_bounds = array<i64: 1>, scalar_prefetch = 0 : i64, scratch_operands = 0 : i64, tpu.core_type = #tpu.core_type<tc>, window_params = [{transform_indices = @transform_0, window_bounds = array<i64: 16, 27>}, {pipeline_mode = #tpu.pipeline_mode<synchronous>, transform_indices = @transform_1, window_bounds = array<i64: 27, 128>}, {pipeline_mode = #tpu.pipeline_mode<synchronous>, transform_indices = @transform_2, window_bounds = array<i64: 1, 128>}, {pipeline_mode = #tpu.pipeline_mode<synchronous>, transform_indices = @transform_3, window_bounds = array<i64: 128, 128>}, {pipeline_mode = #tpu.pipeline_mode<synchronous>, transform_indices = @transform_4, window_bounds = array<i64: 1, 128>}, {transform_indices = @transform_5, window_bounds = array<i64: 16, 128>}]} {
    %c0 = arith.constant 0 : index
    %c0_0 = arith.constant 0 : index
    %0 = vector.load %arg1[%c0, %c0_0] : memref<16x27xf32, #tpu.memory_space<vmem>>, vector<16x27xf32>
    %1 = arith.truncf %0 : vector<16x27xf32> to vector<16x27xbf16>
    %c0_1 = arith.constant 0 : index
    %c0_2 = arith.constant 0 : index
    %2 = vector.load %arg2[%c0_1, %c0_2] : memref<27x128xbf16, #tpu.memory_space<vmem>>, vector<27x128xbf16>
    %cst = arith.constant dense<0.000000e+00> : vector<16x128xf32>
    %3 = tpu.matmul %1, %2, %cst {dimension_numbers = #tpu.dot_dimension_numbers<[1], [0], [0], [1], [0, 0, 1, 1], [], []>} : vector<16x27xbf16>, vector<27x128xbf16>, vector<16x128xf32> -> vector<16x128xf32>
    %c0_3 = arith.constant 0 : index
    %c0_4 = arith.constant 0 : index
    %4 = vector.load %arg3[%c0_3, %c0_4] : memref<1x128xf32, #tpu.memory_space<vmem>>, vector<1x128xf32>
    %5 = vector.broadcast %4 : vector<1x128xf32> to vector<16x128xf32>
    %6 = arith.addf %3, %5 : vector<16x128xf32>
    %cst_5 = arith.constant 0.000000e+00 : f32
    %7 = vector.broadcast %cst_5 : f32 to vector<16x128xf32>
    %8 = arith.maximumf %6, %7 : vector<16x128xf32>
    %9 = arith.truncf %8 : vector<16x128xf32> to vector<16x128xbf16>
    %c0_6 = arith.constant 0 : index
    %c0_7 = arith.constant 0 : index
    %10 = vector.load %arg4[%c0_6, %c0_7] : memref<128x128xbf16, #tpu.memory_space<vmem>>, vector<128x128xbf16>
    %cst_8 = arith.constant dense<0.000000e+00> : vector<16x128xf32>
    %11 = tpu.matmul %9, %10, %cst_8 {dimension_numbers = #tpu.dot_dimension_numbers<[1], [0], [0], [1], [0, 0, 1, 1], [], []>} : vector<16x128xbf16>, vector<128x128xbf16>, vector<16x128xf32> -> vector<16x128xf32>
    %c0_9 = arith.constant 0 : index
    %c0_10 = arith.constant 0 : index
    %12 = vector.load %arg5[%c0_9, %c0_10] : memref<1x128xf32, #tpu.memory_space<vmem>>, vector<1x128xf32>
    %13 = vector.broadcast %12 : vector<1x128xf32> to vector<16x128xf32>
    %14 = arith.addf %11, %13 : vector<16x128xf32>
    %c0_11 = arith.constant 0 : index
    %c0_12 = arith.constant 0 : index
    %15 = vector.load %arg6[%c0_11, %c0_12] : memref<16x128xf32, #tpu.memory_space<vmem>>, vector<16x128xf32>
    tpu.vector_store %arg6[%c0_11, %c0_12], %14 {strides = array<i32>} : memref<16x128xf32, #tpu.memory_space<vmem>>, vector<16x128xf32>,
    return
  }
  func.func @transform_0(%arg0: i32) -> (i32, i32) {
    %c0_i32 = arith.constant 0 : i32
    %c0_i32_0 = arith.constant 0 : i32
    return %arg0, %c0_i32 : i32, i32
  }
  func.func @transform_1(%arg0: i32) -> (i32, i32) {
    %c0_i32 = arith.constant 0 : i32
    %c0_i32_0 = arith.constant 0 : i32
    %c0_i32_1 = arith.constant 0 : i32
    return %c0_i32, %c0_i32_0 : i32, i32
  }
  func.func @transform_2(%arg0: i32) -> (i32, i32) {
    %c0_i32 = arith.constant 0 : i32
    %c0_i32_0 = arith.constant 0 : i32
    %c0_i32_1 = arith.constant 0 : i32
    return %c0_i32, %c0_i32_0 : i32, i32
  }
  func.func @transform_3(%arg0: i32) -> (i32, i32) {
    %c0_i32 = arith.constant 0 : i32
    %c0_i32_0 = arith.constant 0 : i32
    %c0_i32_1 = arith.constant 0 : i32
    return %c0_i32, %c0_i32_0 : i32, i32
  }
  func.func @transform_4(%arg0: i32) -> (i32, i32) {
    %c0_i32 = arith.constant 0 : i32
    %c0_i32_0 = arith.constant 0 : i32
    %c0_i32_1 = arith.constant 0 : i32
    return %c0_i32, %c0_i32_0 : i32, i32
  }
  func.func @transform_5(%arg0: i32) -> (i32, i32) {
    %c0_i32 = arith.constant 0 : i32
    %c0_i32_0 = arith.constant 0 : i32
    return %arg0, %c0_i32 : i32, i32
  }
}

</mosaic_0001>

<llo_original>
// kernel: mlp_forward.1
$region0: #{mlp_forward.1}
  #allocation0 [shape = 'u32[]', space=smem, size = 0x4, offset = 0x4, fixed_abs, tag = 'smem constant byte address 0x4 - core index']
  #allocation1 [shape = 'u32[72,128]{1,0:T(1,128)}', space=vmem, size = 0x9000, scoped, tag = 'internal scratch']
  %s0 = inlined_call_operand.hbm [shape: f32[16,27], index: 0, kind: input, shape index: {}]
  %s1 = inlined_call_operand.hbm [shape: bf16[27,128], index: 1, kind: input, shape index: {}]
  %s2 = inlined_call_operand.vmem [shape: f32[1,128], index: 2, kind: input, shape index: {}]
  %s3 = inlined_call_operand.hbm [shape: bf16[128,128], index: 3, kind: input, shape index: {}]
  %s4 = inlined_call_operand.vmem [shape: f32[1,128], index: 4, kind: input, shape index: {}]
  %s5 = inlined_call_operand.hbm [shape: f32[16,128], index: 5, kind: output, shape index: {}]
  %s6 = sld [smem:[#allocation0]]
  $region42: #{mlp_forward.1} parent=0
    _
  %s8 = ssub.s32 1, %s6
  %s9 = scalar_select 0, %s8, %s6
  $region1: #{mlp_forward.1} parent=0
    #allocation2 [shape = 'u8[8192]{0}', space=vmem, size = 0x2000, scoped, tag = 'input window, operand 0, single buffered']
    #allocation3 [shape = 's32[1]{0}', space=sflag, size = 0x4, scoped, tag = 'scoped memory for mlp_forward.1']
    #allocation4 [shape = 's32[1]{0}', space=sflag, size = 0x4, scoped, tag = 'scoped memory for mlp_forward.1']
    #allocation5 [shape = 'u8[8192]{0}', space=vmem, size = 0x2000, scoped, tag = 'input window, operand 1, single buffered']
    #allocation6 [shape = 's32[1]{0}', space=sflag, size = 0x4, scoped, tag = 'scoped memory for mlp_forward.1']
    #allocation7 [shape = 'u8[32768]{0}', space=vmem, size = 0x8000, scoped, tag = 'input window, operand 3, single buffered']
    #allocation8 [shape = 'u8[8192]{0}', space=vmem, size = 0x2000, scoped, tag = 'output window, operand 0, single buffered']
    %10 = vsyncpa [#allocation3], 0
    %11 = vsyncpa [#allocation6], 0
    %12 = vsyncpa [#allocation4], 0
    // Predicated region
    $region2: #{mlp_forward.1} parent=1 // pred_check
      _
    $region3: #{mlp_forward.1} parent=1 // pred_check_branch
      %14 = sbr.rel (0) target = $region5
    $region4: #{mlp_forward.1} parent=1 // pred_region
      %16 = vsyncadd [#allocation3], 0
      %s17 = sshll.u32 %s0, 4
      %s18 = int_to_ptr.hbm [resolvable:$true] %s17
      %s19 = sshll.u32 [#allocation2], 4
      %s20 = int_to_ptr.vmem [resolvable:$true] %s19
      %25 = dma.hbm_to_vmem [thread:$0]  %s18, 256, %s20, [#allocation3], 128, 128, 8
    $region5: #{mlp_forward.1} parent=1 // pred_fallthru
      _
    // Predicated region
    $region6: #{mlp_forward.1} parent=1 // pred_check
      _
    $region7: #{mlp_forward.1} parent=1 // pred_check_branch
      %27 = sbr.rel (0) target = $region9
    $region8: #{mlp_forward.1} parent=1 // pred_region
      %29 = vsyncadd [#allocation6], 0
      %s30 = sshll.u32 %s1, 4
      %s31 = int_to_ptr.hbm [resolvable:$true] %s30
      %s32 = sshll.u32 [#allocation5], 4
      %s33 = int_to_ptr.vmem [resolvable:$true] %s32
      %38 = dma.hbm_to_vmem [thread:$0]  %s31, 256, %s33, [#allocation6], 64, 64, 4
    $region9: #{mlp_forward.1} parent=1 // pred_fallthru
      _
    // Predicated region
    $region10: #{mlp_forward.1} parent=1 // pred_check
      _
    $region11: #{mlp_forward.1} parent=1 // pred_check_branch
      %40 = sbr.rel (0) target = $region13
    $region12: #{mlp_forward.1} parent=1 // pred_region
      _
    $region13: #{mlp_forward.1} parent=1 // pred_fallthru
      _
    // Predicated region
    $region14: #{mlp_forward.1} parent=1 // pred_check
      _
    $region15: #{mlp_forward.1} parent=1 // pred_check_branch
      %42 = sbr.rel (0) target = $region17
    $region16: #{mlp_forward.1} parent=1 // pred_region
      %44 = vsyncadd [#allocation6], 0
      %s45 = sshll.u32 %s3, 4
      %s46 = int_to_ptr.hbm [resolvable:$true] %s45
      %s47 = sshll.u32 [#allocation7], 4
      %s48 = int_to_ptr.vmem [resolvable:$true] %s47
      %53 = dma.hbm_to_vmem [thread:$0]  %s46, 1024, %s48, [#allocation6], 64, 64, 4
    $region17: #{mlp_forward.1} parent=1 // pred_fallthru
      _
    // Predicated region
    $region18: #{mlp_forward.1} parent=1 // pred_check
      _
    $region19: #{mlp_forward.1} parent=1 // pred_check_branch
      %55 = sbr.rel (0) target = $region21
    $region20: #{mlp_forward.1} parent=1 // pred_region
      _
    $region21: #{mlp_forward.1} parent=1 // pred_fallthru
      _
    // Predicated region
    $region22: #{mlp_forward.1} parent=1 // pred_check
      _
    $region23: #{mlp_forward.1} parent=1 // pred_check_branch
      %57 = sbr.rel (0) target = $region25
    $region24: #{mlp_forward.1} parent=1 // pred_region
      %59 = dma.done [#allocation3], 256
    $region25: #{mlp_forward.1} parent=1 // pred_fallthru
      _
    // Predicated region
    $region26: #{mlp_forward.1} parent=1 // pred_check
      _
    $region27: #{mlp_forward.1} parent=1 // pred_check_branch
      %61 = sbr.rel (0) target = $region29
    $region28: #{mlp_forward.1} parent=1 // pred_region
      %63 = dma.done [#allocation6], 256
    $region29: #{mlp_forward.1} parent=1 // pred_fallthru
      _
    // Predicated region
    $region30: #{mlp_forward.1} parent=1 // pred_check
      _
    $region31: #{mlp_forward.1} parent=1 // pred_check_branch
      %65 = sbr.rel (0) target = $region33
    $region32: #{mlp_forward.1} parent=1 // pred_region
      %67 = dma.done [#allocation6], 1024
    $region33: #{mlp_forward.1} parent=1 // pred_fallthru
      _
    %v69 = vld [vmem:[#allocation2] sm:$0xff]
    %v70 = vld [vmem:[#allocation2 + $0x8] sm:$0xff]
    %v71 = vpack.c.bf16 %v70, %v69
    %v72 = vld [vmem:[#allocation5] sm:$0xf]
    %v73 = vld [vmem:[#allocation5 + $0x4] sm:$0xf]
    %v74 = vld [vmem:[#allocation5 + $0x8] sm:$0xf]
    %v75 = vld [vmem:[#allocation5 + $0xc] sm:$0x3]
    %v76 = vld [vmem:[%s2] sm:$0x1]
    %v78 = vperm.slane %v76, 0
    %v84 = vunpack.c.l.b16 %v72
    %v85 = vunpack.c.l.b16 %v73
    %v86 = vunpack.c.l.b16 %v74
    %v87 = vunpack.c.l.b16 %v75
    %v88 = vpack.c.b16 %v85, %v84
    %v89 = vpack.c.b16 %v87, %v86
    %vm91 = vcmask 220160
    %v93 = vsel %vm91, %v71, 0
    %vm95 = vcmask 1044480
    %vm96 = vcmask 1045504
    %v97 = vsel %vm95, 4294967295, 65535
    %v98 = vsel %vm96, %v97, 0
    %v100 = vand.u32 %v89, %v98
    %102 = vmatpush.bf16.msra.mxu0 0
    %103 = vmatpush.bf16.msra.mxu0 0
    %104 = vmatpush.bf16.msra.mxu0 0
    %105 = vmatpush.bf16.msra.mxu0 0
    %106 = vmatpush.bf16.msra.mxu0 0
    %107 = vmatpush.bf16.msra.mxu0 0
    %108 = vmatpush.bf16.msra.mxu0 %v100
    %109 = vmatpush.bf16.msra.mxu0 %v88
    %110 = vmatmul.bf16.gmra.mxu0 %v93
    %v111 = vpop.f32.mrf.mxu0
    %v112 = vadd.f32 %v78, %v111
    %v113 = vpop.f32.mrf.mxu0
    %v114 = vadd.f32 %v78, %v113
    %115 = vdwg.mxu0
    %v116 = vmax.f32 %v112, 0.0
    %v117 = vmax.f32 %v114, 0.0
    %v118 = vpack.c.bf16 %v117, %v116
    %v119 = vld [vmem:[#allocation7] sm:$0xf]
    %v120 = vld [vmem:[#allocation7 + $0x4] sm:$0xf]
    %v121 = vld [vmem:[#allocation7 + $0x8] sm:$0xf]
    %v122 = vld [vmem:[#allocation7 + $0xc] sm:$0xf]
    %v123 = vld [vmem:[#allocation7 + $0x10] sm:$0xf]
    %v124 = vld [vmem:[#allocation7 + $0x14] sm:$0xf]
    %v125 = vld [vmem:[#allocation7 + $0x18] sm:$0xf]
    %v126 = vld [vmem:[#allocation7 + $0x1c] sm:$0xf]
    %v127 = vld [vmem:[#allocation7 + $0x20] sm:$0xf]
    %v128 = vld [vmem:[#allocation7 + $0x24] sm:$0xf]
    %v129 = vld [vmem:[#allocation7 + $0x28] sm:$0xf]
    %v130 = vld [vmem:[#allocation7 + $0x2c] sm:$0xf]
    %v131 = vld [vmem:[#allocation7 + $0x30] sm:$0xf]
    %v132 = vld [vmem:[#allocation7 + $0x34] sm:$0xf]
    %v133 = vld [vmem:[#allocation7 + $0x38] sm:$0xf]
    %v134 = vld [vmem:[#allocation7 + $0x3c] sm:$0xf]
    %v135 = vld [vmem:[%s4] sm:$0x1]
    %v137 = vperm.slane %v135, 0
    %v155 = vunpack.c.l.b16 %v119
    %v156 = vunpack.c.l.b16 %v120
    %v157 = vunpack.c.l.b16 %v121
    %v158 = vunpack.c.l.b16 %v122
    %v159 = vunpack.c.l.b16 %v123
    %v160 = vunpack.c.l.b16 %v124
    %v161 = vunpack.c.l.b16 %v125
    %v162 = vunpack.c.l.b16 %v126
    %v163 = vunpack.c.l.b16 %v127
    %v164 = vunpack.c.l.b16 %v128
    %v165 = vunpack.c.l.b16 %v129
    %v166 = vunpack.c.l.b16 %v130
    %v167 = vunpack.c.l.b16 %v131
    %v168 = vunpack.c.l.b16 %v132
    %v169 = vunpack.c.l.b16 %v133
    %v170 = vunpack.c.l.b16 %v134
    %v171 = vpack.c.b16 %v156, %v155
    %v172 = vpack.c.b16 %v158, %v157
    %v173 = vpack.c.b16 %v160, %v159
    %v174 = vpack.c.b16 %v162, %v161
    %v175 = vpack.c.b16 %v164, %v163
    %v176 = vpack.c.b16 %v166, %v165
    %v177 = vpack.c.b16 %v168, %v167
    %v178 = vpack.c.b16 %v170, %v169
    %187 = vmatpush.bf16.msra.mxu0 %v178
    %188 = vmatpush.bf16.msra.mxu0 %v177
    %189 = vmatpush.bf16.msra.mxu0 %v176
    %190 = vmatpush.bf16.msra.mxu0 %v175
    %191 = vmatpush.bf16.msra.mxu0 %v174
    %192 = vmatpush.bf16.msra.mxu0 %v173
    %193 = vmatpush.bf16.msra.mxu0 %v172
    %194 = vmatpush.bf16.msra.mxu0 %v171
    %195 = vmatmul.bf16.gmra.mxu0 %v118
    %v196 = vpop.f32.mrf.mxu0
    %v197 = vadd.f32 %v137, %v196
    %v198 = vpop.f32.mrf.mxu0
    %v199 = vadd.f32 %v137, %v198
    %200 = vdwg.mxu0
    %201 = vst [vmem:[#allocation8] sm:$0xff] %v197
    %202 = vst [vmem:[#allocation8 + $0x8] sm:$0xff] %v199
    // Predicated region
    $region34: #{mlp_forward.1} parent=1 // pred_check
      _
    $region35: #{mlp_forward.1} parent=1 // pred_check_branch
      %204 = sbr.rel (0) target = $region37
    $region36: #{mlp_forward.1} parent=1 // pred_region
      %206 = vsyncadd [#allocation4], 0
      %s207 = sshll.u32 [#allocation8], 4
      %s208 = int_to_ptr.vmem [resolvable:$true] %s207
      %s209 = sshll.u32 %s5, 4
      %s210 = int_to_ptr.hbm [resolvable:$true] %s209
      %215 = dma.vmem_to_hbm [thread:$0]  %s208, 256, %s210, [#allocation4], 128, 128, 8
    $region37: #{mlp_forward.1} parent=1 // pred_fallthru
      _
    // Predicated region
    $region38: #{mlp_forward.1} parent=1 // pred_check
      _
    $region39: #{mlp_forward.1} parent=1 // pred_check_branch
      %217 = sbr.rel (0) target = $region41
    $region40: #{mlp_forward.1} parent=1 // pred_region
      %219 = dma.done [#allocation4], 256
    $region41: #{mlp_forward.1} parent=1 // pred_fallthru
      _
    %220 = vsyncpa [#allocation3], 1
    %221 = vsyncpa [#allocation6], 1
    %222 = vsyncpa [#allocation4], 1

</llo_original>
